<compile_context>
chip_gen: v5e
topology: v5e:2x2
jax: 0.10.0
libtpu: 0.0.40
codegen_flags: <defaults>
</compile_context>

<pallas_src>
import functools

import jax
import jax.numpy as jnp
from jax.experimental import pallas as pl
from jax.experimental.pallas import tpu as pltpu

NPAD = 128  # lane-dense padded width for the fc2 / softmax path


def _round_up(x, m):
    return ((x + m - 1) // m) * m


def mlp_kernel(tok_ref, emb_ref, w1_ref, b1_ref, w2_ref, b2_ref, out_ref):
    # tok_ref: (tb, S)    int32 token ids
    # emb_ref: (V, E)     embedding table (f32)
    # w1_ref:  (E, H), b1_ref: (1, H)
    # w2_ref:  (H, NPAD)  real weights in cols [:2], zeros elsewhere
    # b2_ref:  (1, NPAD)  real bias in cols [:2], -1e30 elsewhere
    # out_ref: (tb, NPAD) softmax probs in cols [:2], zeros elsewhere
    tb, S = tok_ref.shape
    V = emb_ref.shape[0]

    tok = tok_ref[...]                                            # (tb, S) int32

    # --- fused embedding-gather + mean(dim=1) --------------------------------
    # 2-D histogram of token ids: counts[b, v] = #{s : tok[b, s] == v}.
    # Built with an unrolled compare-accumulate over the S columns so the live
    # vector state is only (tb, V), then one MXU matmul against the table.
    iota_v = jax.lax.broadcasted_iota(jnp.int32, (tb, V), 1)      # (tb, V)
    counts = jnp.zeros((tb, V), jnp.float32)
    for s in range(S):  # S is a static block-shape constant; small unrolled loop
        counts = counts + (tok[:, s:s + 1] == iota_v).astype(jnp.float32)

    mean_emb = jnp.dot(counts, emb_ref[...],
                       preferred_element_type=jnp.float32) * (1.0 / S)  # (tb, E)

    # --- fc1 + ReLU -----------------------------------------------------------
    h = jnp.dot(mean_emb, w1_ref[...],
                preferred_element_type=jnp.float32) + b1_ref[...]       # (tb, H)
    h = jnp.maximum(h, 0.0)

    # --- fc2 (lane-dense, 128 padded output lanes) ----------------------------
    logits = jnp.dot(h, w2_ref[...],
                     preferred_element_type=jnp.float32) + b2_ref[...]  # (tb, NPAD)

    # --- softmax over the class axis (pad lanes have -1e30 -> exp == 0) -------
    z = logits - jnp.max(logits, axis=1, keepdims=True)
    e = jnp.exp(z)
    denom = jnp.sum(e, axis=1, keepdims=True)
    inv = pl.reciprocal(denom, approx=True)          # EUP vrcp (free slot)
    inv = inv * (2.0 - denom * inv)                  # one Newton step -> f32-exact
    out_ref[...] = e * inv


def prepare_params(emb_table, w1, b1, w2, b2):
    """One-time parameter prep (padding / reshapes / casts), hoisted out of the
    forward pass so it is not re-materialized on every call."""
    H = w1.shape[1]
    w2_pad = jnp.zeros((H, NPAD), jnp.float32).at[:, :2].set(w2.astype(jnp.float32))
    b2_pad = jnp.full((1, NPAD), -1e30, jnp.float32).at[0, :2].set(
        b2.astype(jnp.float32))
    b1_2d = b1.reshape(1, H).astype(jnp.float32)
    return (emb_table.astype(jnp.float32), w1.astype(jnp.float32),
            b1_2d, w2_pad, b2_pad)


@functools.partial(jax.jit, static_argnames=("tb",))
def mlp_forward(tokens, emb_table, w1, b1_2d, w2_pad, b2_pad, *, tb=128):
    """tokens: (B, S) int32 token ids -> (B, 2) float32 probabilities."""
    B, S = tokens.shape
    V, E = emb_table.shape
    H = w1.shape[1]

    # Batch tile: default 128 (fills the MXU M dim, amortizes per-step
    # overhead); clamp for tiny batches so the demo doesn't pad 16x.
    tb_eff = min(tb, _round_up(B, 8))
    Bp = _round_up(B, tb_eff)
    if Bp != B:
        tokens = jnp.pad(tokens, ((0, Bp - B), (0, 0)))

    grid = (Bp // tb_eff,)
    out_pad = pl.pallas_call(
        mlp_kernel,
        out_shape=jax.ShapeDtypeStruct((Bp, NPAD), jnp.float32),
        grid_spec=pltpu.PrefetchScalarGridSpec(
            num_scalar_prefetch=0,
            grid=grid,
            in_specs=[
                pl.BlockSpec((tb_eff, S), lambda i: (i, 0)),   # tokens (tiled on B)
                pl.BlockSpec((V, E), lambda i: (0, 0)),        # emb_table (whole)
                pl.BlockSpec((E, H), lambda i: (0, 0)),        # w1 (whole)
                pl.BlockSpec((1, H), lambda i: (0, 0)),        # b1 (whole)
                pl.BlockSpec((H, NPAD), lambda i: (0, 0)),     # w2 padded (whole)
                pl.BlockSpec((1, NPAD), lambda i: (0, 0)),     # b2 padded (whole)
            ],
            out_specs=pl.BlockSpec((tb_eff, NPAD), lambda i: (i, 0)),
        ),
        compiler_params=pltpu.CompilerParams(
            dimension_semantics=("parallel",)),
    )(tokens, emb_table, w1, b1_2d, w2_pad, b2_pad)

    # Drop batch padding and the padded class lanes (cheap XLA slice).
    return out_pad[:B, :2]


def init_params(key, vocab_size, embedding_dim, hidden_size):
    k_emb, k_w1, k_b1, k_w2, k_b2 = jax.random.split(key, 5)
    # nn.Embedding: N(0, 1)
    emb_table = jax.random.normal(k_emb, (vocab_size, embedding_dim), jnp.float32)
    # nn.Linear: U(-1/sqrt(fan_in), 1/sqrt(fan_in)) for weight and bias.
    bound1 = 1.0 / jnp.sqrt(embedding_dim)
    w1 = jax.random.uniform(k_w1, (embedding_dim, hidden_size), jnp.float32,
                            -bound1, bound1)
    b1 = jax.random.uniform(k_b1, (hidden_size,), jnp.float32, -bound1, bound1)
    bound2 = 1.0 / jnp.sqrt(hidden_size)
    w2 = jax.random.uniform(k_w2, (hidden_size, 2), jnp.float32, -bound2, bound2)
    b2 = jax.random.uniform(k_b2, (2,), jnp.float32, -bound2, bound2)
    return emb_table, w1, b1, w2, b2


if __name__ == "__main__":
    vocab_size, embedding_dim, hidden_size = 32, 16, 32
    batch, seq = 8, 8

    key = jax.random.PRNGKey(0)
    k_params, k_tokens = jax.random.split(key)
    emb_table, w1, b1, w2, b2 = init_params(k_params, vocab_size,
                                            embedding_dim, hidden_size)
    tokens = jax.random.randint(k_tokens, (batch, seq), 0, vocab_size,
                                dtype=jnp.int32)

    params = prepare_params(emb_table, w1, b1, w2, b2)
    out = mlp_forward(tokens, *params)
    out = jax.block_until_ready(out)

    # Pure-JAX reference check (same math, no Pallas).
    emb = jnp.take(emb_table, tokens, axis=0)
    m = emb.mean(axis=1)
    h = jnp.maximum(m @ w1 + b1, 0.0)
    ref = jax.nn.softmax(h @ w2 + b2, axis=1)
    assert out.shape == (batch, 2)
    assert jnp.allclose(out, ref, atol=1e-5, rtol=1e-5), (out, ref)

    print("KERNEL_OK")
</pallas_src>

<mosaic_0001>
module attributes {stable_mosaic.version = 11 : i64} {
  func.func @mlp_kernel(%arg0: i32, %arg1: memref<8x8xi32, #tpu.memory_space<vmem>>, %arg2: memref<32x16xf32, #tpu.memory_space<vmem>>, %arg3: memref<16x32xf32, #tpu.memory_space<vmem>>, %arg4: memref<1x32xf32, #tpu.memory_space<vmem>>, %arg5: memref<32x128xf32, #tpu.memory_space<vmem>>, %arg6: memref<1x128xf32, #tpu.memory_space<vmem>>, %arg7: memref<8x128xf32, #tpu.memory_space<vmem>>) attributes {dimension_semantics = [#tpu.dimension_semantics<parallel>], iteration_bounds = array<i64: 1>, scalar_prefetch = 0 : i64, scratch_operands = 0 : i64, tpu.core_type = #tpu.core_type<tc>, window_params = [{transform_indices = @transform_0, window_bounds = array<i64: 8, 8>}, {pipeline_mode = #tpu.pipeline_mode<synchronous>, transform_indices = @transform_1, window_bounds = array<i64: 32, 16>}, {pipeline_mode = #tpu.pipeline_mode<synchronous>, transform_indices = @transform_2, window_bounds = array<i64: 16, 32>}, {pipeline_mode = #tpu.pipeline_mode<synchronous>, transform_indices = @transform_3, window_bounds = array<i64: 1, 32>}, {pipeline_mode = #tpu.pipeline_mode<synchronous>, transform_indices = @transform_4, window_bounds = array<i64: 32, 128>}, {pipeline_mode = #tpu.pipeline_mode<synchronous>, transform_indices = @transform_5, window_bounds = array<i64: 1, 128>}, {transform_indices = @transform_6, window_bounds = array<i64: 8, 128>}]} {
    %c0 = arith.constant 0 : index
    %c0_0 = arith.constant 0 : index
    %0 = vector.load %arg1[%c0, %c0_0] : memref<8x8xi32, #tpu.memory_space<vmem>>, vector<8x8xi32>
    %1 = tpu.iota {dimensions = array<i32: 1>} : vector<8x32xi32>
    %cst = arith.constant 0.000000e+00 : f32
    %2 = vector.broadcast %cst : f32 to vector<8x32xf32>
    %3 = vector.extract_strided_slice %0 {offsets = [0, 0], sizes = [8, 1], strides = [1, 1]} : vector<8x8xi32> to vector<8x1xi32>
    %4 = vector.broadcast %3 : vector<8x1xi32> to vector<8x32xi32>
    %5 = arith.cmpi eq, %4, %1 : vector<8x32xi32>
    %6 = arith.extui %5 : vector<8x32xi1> to vector<8x32xi32>
    %7 = arith.sitofp %6 : vector<8x32xi32> to vector<8x32xf32>
    %8 = arith.addf %2, %7 : vector<8x32xf32>
    %9 = vector.extract_strided_slice %0 {offsets = [0, 1], sizes = [8, 1], strides = [1, 1]} : vector<8x8xi32> to vector<8x1xi32>
    %10 = vector.broadcast %9 : vector<8x1xi32> to vector<8x32xi32>
    %11 = arith.cmpi eq, %10, %1 : vector<8x32xi32>
    %12 = arith.extui %11 : vector<8x32xi1> to vector<8x32xi32>
    %13 = arith.sitofp %12 : vector<8x32xi32> to vector<8x32xf32>
    %14 = arith.addf %8, %13 : vector<8x32xf32>
    %15 = vector.extract_strided_slice %0 {offsets = [0, 2], sizes = [8, 1], strides = [1, 1]} : vector<8x8xi32> to vector<8x1xi32>
    %16 = vector.broadcast %15 : vector<8x1xi32> to vector<8x32xi32>
    %17 = arith.cmpi eq, %16, %1 : vector<8x32xi32>
    %18 = arith.extui %17 : vector<8x32xi1> to vector<8x32xi32>
    %19 = arith.sitofp %18 : vector<8x32xi32> to vector<8x32xf32>
    %20 = arith.addf %14, %19 : vector<8x32xf32>
    %21 = vector.extract_strided_slice %0 {offsets = [0, 3], sizes = [8, 1], strides = [1, 1]} : vector<8x8xi32> to vector<8x1xi32>
    %22 = vector.broadcast %21 : vector<8x1xi32> to vector<8x32xi32>
    %23 = arith.cmpi eq, %22, %1 : vector<8x32xi32>
    %24 = arith.extui %23 : vector<8x32xi1> to vector<8x32xi32>
    %25 = arith.sitofp %24 : vector<8x32xi32> to vector<8x32xf32>
    %26 = arith.addf %20, %25 : vector<8x32xf32>
    %27 = vector.extract_strided_slice %0 {offsets = [0, 4], sizes = [8, 1], strides = [1, 1]} : vector<8x8xi32> to vector<8x1xi32>
    %28 = vector.broadcast %27 : vector<8x1xi32> to vector<8x32xi32>
    %29 = arith.cmpi eq, %28, %1 : vector<8x32xi32>
    %30 = arith.extui %29 : vector<8x32xi1> to vector<8x32xi32>
    %31 = arith.sitofp %30 : vector<8x32xi32> to vector<8x32xf32>
    %32 = arith.addf %26, %31 : vector<8x32xf32>
    %33 = vector.extract_strided_slice %0 {offsets = [0, 5], sizes = [8, 1], strides = [1, 1]} : vector<8x8xi32> to vector<8x1xi32>
    %34 = vector.broadcast %33 : vector<8x1xi32> to vector<8x32xi32>
    %35 = arith.cmpi eq, %34, %1 : vector<8x32xi32>
    %36 = arith.extui %35 : vector<8x32xi1> to vector<8x32xi32>
    %37 = arith.sitofp %36 : vector<8x32xi32> to vector<8x32xf32>
    %38 = arith.addf %32, %37 : vector<8x32xf32>
    %39 = vector.extract_strided_slice %0 {offsets = [0, 6], sizes = [8, 1], strides = [1, 1]} : vector<8x8xi32> to vector<8x1xi32>
    %40 = vector.broadcast %39 : vector<8x1xi32> to vector<8x32xi32>
    %41 = arith.cmpi eq, %40, %1 : vector<8x32xi32>
    %42 = arith.extui %41 : vector<8x32xi1> to vector<8x32xi32>
    %43 = arith.sitofp %42 : vector<8x32xi32> to vector<8x32xf32>
    %44 = arith.addf %38, %43 : vector<8x32xf32>
    %45 = vector.extract_strided_slice %0 {offsets = [0, 7], sizes = [8, 1], strides = [1, 1]} : vector<8x8xi32> to vector<8x1xi32>
    %46 = vector.broadcast %45 : vector<8x1xi32> to vector<8x32xi32>
    %47 = arith.cmpi eq, %46, %1 : vector<8x32xi32>
    %48 = arith.extui %47 : vector<8x32xi1> to vector<8x32xi32>
    %49 = arith.sitofp %48 : vector<8x32xi32> to vector<8x32xf32>
    %50 = arith.addf %44, %49 : vector<8x32xf32>
    %c0_1 = arith.constant 0 : index
    %c0_2 = arith.constant 0 : index
    %51 = vector.load %arg2[%c0_1, %c0_2] : memref<32x16xf32, #tpu.memory_space<vmem>>, vector<32x16xf32>
    %cst_3 = arith.constant dense<0.000000e+00> : vector<8x16xf32>
    %52 = tpu.matmul %50, %51, %cst_3 {dimension_numbers = #tpu.dot_dimension_numbers<[1], [0], [0], [1], [0, 0, 1, 1], [], []>} : vector<8x32xf32>, vector<32x16xf32>, vector<8x16xf32> -> vector<8x16xf32>
    %cst_4 = arith.constant 1.250000e-01 : f32
    %53 = vector.broadcast %cst_4 : f32 to vector<8x16xf32>
    %54 = arith.mulf %52, %53 : vector<8x16xf32>
    %c0_5 = arith.constant 0 : index
    %c0_6 = arith.constant 0 : index
    %55 = vector.load %arg3[%c0_5, %c0_6] : memref<16x32xf32, #tpu.memory_space<vmem>>, vector<16x32xf32>
    %cst_7 = arith.constant dense<0.000000e+00> : vector<8x32xf32>
    %56 = tpu.matmul %54, %55, %cst_7 {dimension_numbers = #tpu.dot_dimension_numbers<[1], [0], [0], [1], [0, 0, 1, 1], [], []>} : vector<8x16xf32>, vector<16x32xf32>, vector<8x32xf32> -> vector<8x32xf32>
    %c0_8 = arith.constant 0 : index
    %c0_9 = arith.constant 0 : index
    %57 = vector.load %arg4[%c0_8, %c0_9] : memref<1x32xf32, #tpu.memory_space<vmem>>, vector<1x32xf32>
    %58 = vector.broadcast %57 : vector<1x32xf32> to vector<8x32xf32>
    %59 = arith.addf %56, %58 : vector<8x32xf32>
    %cst_10 = arith.constant 0.000000e+00 : f32
    %60 = vector.broadcast %cst_10 : f32 to vector<8x32xf32>
    %61 = arith.maximumf %59, %60 : vector<8x32xf32>
    %c0_11 = arith.constant 0 : index
    %c0_12 = arith.constant 0 : index
    %62 = vector.load %arg5[%c0_11, %c0_12] : memref<32x128xf32, #tpu.memory_space<vmem>>, vector<32x128xf32>
    %cst_13 = arith.constant dense<0.000000e+00> : vector<8x128xf32>
    %63 = tpu.matmul %61, %62, %cst_13 {dimension_numbers = #tpu.dot_dimension_numbers<[1], [0], [0], [1], [0, 0, 1, 1], [], []>} : vector<8x32xf32>, vector<32x128xf32>, vector<8x128xf32> -> vector<8x128xf32>
    %c0_14 = arith.constant 0 : index
    %c0_15 = arith.constant 0 : index
    %64 = vector.load %arg6[%c0_14, %c0_15] : memref<1x128xf32, #tpu.memory_space<vmem>>, vector<1x128xf32>
    %65 = vector.broadcast %64 : vector<1x128xf32> to vector<8x128xf32>
    %66 = arith.addf %63, %65 : vector<8x128xf32>
    %cst_16 = arith.constant dense<0xFF800000> : vector<8xf32>
    %67 = vector.multi_reduction <maximumf>, %66, %cst_16 [1] : vector<8x128xf32> to vector<8xf32>
    %68 = vector.shape_cast %67 : vector<8xf32> to vector<8x1xf32>
    %69 = vector.broadcast %68 : vector<8x1xf32> to vector<8x128xf32>
    %70 = arith.subf %66, %69 : vector<8x128xf32>
    %71 = math.exp %70 : vector<8x128xf32>
    %cst_17 = arith.constant dense<0.000000e+00> : vector<8xf32>
    %72 = vector.multi_reduction <add>, %71, %cst_17 [1] : vector<8x128xf32> to vector<8xf32>
    %73 = vector.shape_cast %72 : vector<8xf32> to vector<8x1xf32>
    %74 = tpu.reciprocal %73 {approx = true} : vector<8x1xf32> -> vector<8x1xf32>
    %75 = arith.mulf %73, %74 : vector<8x1xf32>
    %cst_18 = arith.constant 2.000000e+00 : f32
    %76 = vector.broadcast %cst_18 : f32 to vector<8x1xf32>
    %77 = arith.subf %76, %75 : vector<8x1xf32>
    %78 = arith.mulf %74, %77 : vector<8x1xf32>
    %79 = vector.broadcast %78 : vector<8x1xf32> to vector<8x128xf32>
    %80 = arith.mulf %71, %79 : vector<8x128xf32>
    %c0_19 = arith.constant 0 : index
    %c0_20 = arith.constant 0 : index
    %81 = vector.load %arg7[%c0_19, %c0_20] : memref<8x128xf32, #tpu.memory_space<vmem>>, vector<8x128xf32>
    tpu.vector_store %arg7[%c0_19, %c0_20], %80 {strides = array<i32>} : memref<8x128xf32, #tpu.memory_space<vmem>>, vector<8x128xf32>,
    return
  }
  func.func @transform_0(%arg0: i32) -> (i32, i32) {
    %c0_i32 = arith.constant 0 : i32
    %c0_i32_0 = arith.constant 0 : i32
    return %arg0, %c0_i32 : i32, i32
  }
  func.func @transform_1(%arg0: i32) -> (i32, i32) {
    %c0_i32 = arith.constant 0 : i32
    %c0_i32_0 = arith.constant 0 : i32
    %c0_i32_1 = arith.constant 0 : i32
    return %c0_i32, %c0_i32_0 : i32, i32
  }
  func.func @transform_2(%arg0: i32) -> (i32, i32) {
    %c0_i32 = arith.constant 0 : i32
    %c0_i32_0 = arith.constant 0 : i32
    %c0_i32_1 = arith.constant 0 : i32
    return %c0_i32, %c0_i32_0 : i32, i32
  }
  func.func @transform_3(%arg0: i32) -> (i32, i32) {
    %c0_i32 = arith.constant 0 : i32
    %c0_i32_0 = arith.constant 0 : i32
    %c0_i32_1 = arith.constant 0 : i32
    return %c0_i32, %c0_i32_0 : i32, i32
  }
  func.func @transform_4(%arg0: i32) -> (i32, i32) {
    %c0_i32 = arith.constant 0 : i32
    %c0_i32_0 = arith.constant 0 : i32
    %c0_i32_1 = arith.constant 0 : i32
    return %c0_i32, %c0_i32_0 : i32, i32
  }
  func.func @transform_5(%arg0: i32) -> (i32, i32) {
    %c0_i32 = arith.constant 0 : i32
    %c0_i32_0 = arith.constant 0 : i32
    %c0_i32_1 = arith.constant 0 : i32
    return %c0_i32, %c0_i32_0 : i32, i32
  }
  func.func @transform_6(%arg0: i32) -> (i32, i32) {
    %c0_i32 = arith.constant 0 : i32
    %c0_i32_0 = arith.constant 0 : i32
    return %arg0, %c0_i32 : i32, i32
  }
}

</mosaic_0001>

<llo_original>
// kernel: mlp_forward.1
$region0: #{mlp_forward.1}
  #allocation0 [shape = 'u32[]', space=smem, size = 0x4, offset = 0x4, fixed_abs, tag = 'smem constant byte address 0x4 - core index']
  #allocation1 [shape = 'u32[72,128]{1,0:T(1,128)}', space=vmem, size = 0x9000, scoped, tag = 'internal scratch']
  %s0 = inlined_call_operand.hbm [shape: s32[8,8], index: 0, kind: input, shape index: {}]
  %s1 = inlined_call_operand.vmem [shape: f32[32,16], index: 1, kind: input, shape index: {}]
  %s2 = inlined_call_operand.vmem [shape: f32[16,32], index: 2, kind: input, shape index: {}]
  %s3 = inlined_call_operand.vmem [shape: f32[1,32], index: 3, kind: input, shape index: {}]
  %s4 = inlined_call_operand.vmem [shape: f32[32,128], index: 4, kind: input, shape index: {}]
  %s5 = inlined_call_operand.vmem [shape: f32[1,128], index: 5, kind: input, shape index: {}]
  %s6 = inlined_call_operand.vmem [shape: f32[8,128], index: 6, kind: output, shape index: {}]
  %s7 = sld [smem:[#allocation0]]
  $region38: #{mlp_forward.1} parent=0
    _
  %s9 = ssub.s32 1, %s7
  %s10 = scalar_select 0, %s9, %s7
  $region1: #{mlp_forward.1} parent=0
    #allocation2 [shape = 'u8[4096]{0}', space=vmem, size = 0x1000, scoped, tag = 'input window, operand 0, single buffered']
    #allocation3 [shape = 's32[1]{0}', space=sflag, size = 0x4, scoped, tag = 'scoped memory for mlp_forward.1']
    %11 = vsyncpa [#allocation3], 0
    // Predicated region
    $region2: #{mlp_forward.1} parent=1 // pred_check
      _
    $region3: #{mlp_forward.1} parent=1 // pred_check_branch
      %13 = sbr.rel (0) target = $region5
    $region4: #{mlp_forward.1} parent=1 // pred_region
      %15 = vsyncadd [#allocation3], 0
      %s17 = sshll.u32 %s0, 4
      %s18 = int_to_ptr.hbm [resolvable:$true] %s17
      %s19 = sshll.u32 [#allocation2], 4
      %s20 = int_to_ptr.vmem [resolvable:$true] %s19
      %22 = dma.hbm_to_vmem [thread:$0]  %s18, 128, %s20, [#allocation3]
    $region5: #{mlp_forward.1} parent=1 // pred_fallthru
      _
    // Predicated region
    $region6: #{mlp_forward.1} parent=1 // pred_check
      _
    $region7: #{mlp_forward.1} parent=1 // pred_check_branch
      %24 = sbr.rel (0) target = $region9
    $region8: #{mlp_forward.1} parent=1 // pred_region
      _
    $region9: #{mlp_forward.1} parent=1 // pred_fallthru
      _
    // Predicated region
    $region10: #{mlp_forward.1} parent=1 // pred_check
      _
    $region11: #{mlp_forward.1} parent=1 // pred_check_branch
      %26 = sbr.rel (0) target = $region13
    $region12: #{mlp_forward.1} parent=1 // pred_region
      _
    $region13: #{mlp_forward.1} parent=1 // pred_fallthru
      _
    // Predicated region
    $region14: #{mlp_forward.1} parent=1 // pred_check
      _
    $region15: #{mlp_forward.1} parent=1 // pred_check_branch
      %28 = sbr.rel (0) target = $region17
    $region16: #{mlp_forward.1} parent=1 // pred_region
      _
    $region17: #{mlp_forward.1} parent=1 // pred_fallthru
      _
    // Predicated region
    $region18: #{mlp_forward.1} parent=1 // pred_check
      _
    $region19: #{mlp_forward.1} parent=1 // pred_check_branch
      %30 = sbr.rel (0) target = $region21
    $region20: #{mlp_forward.1} parent=1 // pred_region
      _
    $region21: #{mlp_forward.1} parent=1 // pred_fallthru
      _
    // Predicated region
    $region22: #{mlp_forward.1} parent=1 // pred_check
      _
    $region23: #{mlp_forward.1} parent=1 // pred_check_branch
      %32 = sbr.rel (0) target = $region25
    $region24: #{mlp_forward.1} parent=1 // pred_region
      _
    $region25: #{mlp_forward.1} parent=1 // pred_fallthru
      _
    // Predicated region
    $region26: #{mlp_forward.1} parent=1 // pred_check
      _
    $region27: #{mlp_forward.1} parent=1 // pred_check_branch
      %34 = sbr.rel (0) target = $region29
    $region28: #{mlp_forward.1} parent=1 // pred_region
      %36 = dma.done [#allocation3], 128
    $region29: #{mlp_forward.1} parent=1 // pred_fallthru
      _
    %v37 = vld [vmem:[#allocation2] sm:$0xff]
    %v38 = vlaneseq
    %v39 = vand.u32 %v38, 127
    %40 = vset.pattern.permute.xlu0 0
    %41 = vperm.xlu0 %40, %v37
    %v42 = vpop.permute.xlu0 %41
    %vm43 = vcmp.eq.s32.totalorder %v42, %v39
    %v44 = vsel %vm43, 1, 0
    %v45 = vcvt.s32.f32 %v44
    %v46 = vadd.f32 %v45, 0.0
    %47 = vset.pattern.permute.xlu0 1
    %48 = vperm.xlu0 %47, %v37
    %v49 = vpop.permute.xlu0 %48
    %vm50 = vcmp.eq.s32.totalorder %v49, %v39
    %v51 = vsel %vm50, 1, 0
    %v52 = vcvt.s32.f32 %v51
    %v53 = vadd.f32 %v46, %v52
    %54 = vset.pattern.permute.xlu0 2
    %55 = vperm.xlu0 %54, %v37
    %v56 = vpop.permute.xlu0 %55
    %vm57 = vcmp.eq.s32.totalorder %v56, %v39
    %v58 = vsel %vm57, 1, 0
    %v59 = vcvt.s32.f32 %v58
    %v60 = vadd.f32 %v53, %v59
    %61 = vset.pattern.permute.xlu0 3
    %62 = vperm.xlu0 %61, %v37
    %v63 = vpop.permute.xlu0 %62
    %vm64 = vcmp.eq.s32.totalorder %v63, %v39
    %v65 = vsel %vm64, 1, 0
    %v66 = vcvt.s32.f32 %v65
    %v67 = vadd.f32 %v60, %v66
    %68 = vset.pattern.permute.xlu0 4
    %69 = vperm.xlu0 %68, %v37
    %v70 = vpop.permute.xlu0 %69
    %vm71 = vcmp.eq.s32.totalorder %v70, %v39
    %v72 = vsel %vm71, 1, 0
    %v73 = vcvt.s32.f32 %v72
    %v74 = vadd.f32 %v67, %v73
    %75 = vset.pattern.permute.xlu0 5
    %76 = vperm.xlu0 %75, %v37
    %v77 = vpop.permute.xlu0 %76
    %vm78 = vcmp.eq.s32.totalorder %v77, %v39
    %v79 = vsel %vm78, 1, 0
    %v80 = vcvt.s32.f32 %v79
    %v81 = vadd.f32 %v74, %v80
    %82 = vset.pattern.permute.xlu0 6
    %83 = vperm.xlu0 %82, %v37
    %v84 = vpop.permute.xlu0 %83
    %vm85 = vcmp.eq.s32.totalorder %v84, %v39
    %v86 = vsel %vm85, 1, 0
    %v87 = vcvt.s32.f32 %v86
    %v88 = vadd.f32 %v81, %v87
    %89 = vset.pattern.permute.xlu0 7
    %90 = vperm.xlu0 %89, %v37
    %v91 = vpop.permute.xlu0 %90
    %vm92 = vcmp.eq.s32.totalorder %v91, %v39
    %v93 = vsel %vm92, 1, 0
    %v94 = vcvt.s32.f32 %v93
    %v95 = vadd.f32 %v88, %v94
    %v96 = vld [vmem:[%s1] sm:$0xff]
    %v97 = vld [vmem:[%s1 + $0x8] sm:$0xff]
    %v98 = vld [vmem:[%s1 + $0x10] sm:$0xff]
    %v99 = vld [vmem:[%s1 + $0x18] sm:$0xff]
    %vm100 = vcmask 261120
    %v102 = vsel %vm100, %v95, 0
    %104 = vmatpush.msra.mxu0 0.0
    %105 = vmatpush.msra.mxu0 0.0
    %106 = vmatpush.msra.mxu0 0.0
    %107 = vmatpush.msra.mxu0 0.0
    %108 = vmatpush.msra.mxu0 0.0
    %109 = vmatpush.msra.mxu0 0.0
    %110 = vmatpush.msra.mxu0 0.0
    %111 = vmatpush.msra.mxu0 0.0
    %112 = vmatpush.msra.mxu0 0.0
    %113 = vmatpush.msra.mxu0 0.0
    %114 = vmatpush.msra.mxu0 0.0
    %115 = vmatpush.msra.mxu0 0.0
    %116 = vmatpush.msra.mxu0 %v99
    %117 = vmatpush.msra.mxu0 %v98
    %118 = vmatpush.msra.mxu0 %v97
    %119 = vmatpush.msra.mxu0 %v96
    %120 = vmatmul.f32.gmra.mxu0 %v102
    %v121 = vpop.f32.mrf.mxu0
    %v122 = vadd.f32 0.0, %v121
    %123 = vdwg.mxu0
    %v124 = vmul.f32 %v122, 0.125
    %v125 = vld [vmem:[%s2] sm:$0xff]
    %v126 = vld [vmem:[%s2 + $0x8] sm:$0xff]
    %v127 = vld [vmem:[%s3] sm:$0x1]
    %v129 = vperm.slane %v127, 0
    %vm131 = vcmask 130048
    %v133 = vsel %vm131, %v124, 0
    %135 = vmatpush.msra.mxu0 0.0
    %136 = vmatpush.msra.mxu0 0.0
    %137 = vmatpush.msra.mxu0 0.0
    %138 = vmatpush.msra.mxu0 0.0
    %139 = vmatpush.msra.mxu0 0.0
    %140 = vmatpush.msra.mxu0 0.0
    %141 = vmatpush.msra.mxu0 0.0
    %142 = vmatpush.msra.mxu0 0.0
    %143 = vmatpush.msra.mxu0 0.0
    %144 = vmatpush.msra.mxu0 0.0
    %145 = vmatpush.msra.mxu0 0.0
    %146 = vmatpush.msra.mxu0 0.0
    %147 = vmatpush.msra.mxu0 0.0
    %148 = vmatpush.msra.mxu0 0.0
    %149 = vmatpush.msra.mxu0 %v126
    %150 = vmatpush.msra.mxu0 %v125
    %151 = vmatmul.f32.gmra.mxu0 %v133
    %v152 = vpop.f32.mrf.mxu0
    %v153 = vadd.f32 %v129, %v152
    %154 = vdwg.mxu0
    %v155 = vmax.f32 %v153, 0.0
    %v156 = vld [vmem:[%s4] sm:$0xff]
    %v157 = vld [vmem:[%s4 + $0x8] sm:$0xff]
    %v158 = vld [vmem:[%s4 + $0x10] sm:$0xff]
    %v159 = vld [vmem:[%s4 + $0x18] sm:$0xff]
    %v160 = vld [vmem:[%s5] sm:$0x1]
    %v162 = vperm.slane %v160, 0
    %v165 = vsel %vm100, %v155, 0
    %167 = vmatpush.msra.mxu0 0.0
    %168 = vmatpush.msra.mxu0 0.0
    %169 = vmatpush.msra.mxu0 0.0
    %170 = vmatpush.msra.mxu0 0.0
    %171 = vmatpush.msra.mxu0 0.0
    %172 = vmatpush.msra.mxu0 0.0
    %173 = vmatpush.msra.mxu0 0.0
    %174 = vmatpush.msra.mxu0 0.0
    %175 = vmatpush.msra.mxu0 0.0
    %176 = vmatpush.msra.mxu0 0.0
    %177 = vmatpush.msra.mxu0 0.0
    %178 = vmatpush.msra.mxu0 0.0
    %179 = vmatpush.msra.mxu0 %v159
    %180 = vmatpush.msra.mxu0 %v158
    %181 = vmatpush.msra.mxu0 %v157
    %182 = vmatpush.msra.mxu0 %v156
    %183 = vmatmul.f32.gmra.mxu0 %v165
    %v184 = vpop.f32.mrf.mxu0
    %v185 = vadd.f32 %v162, %v184
    %186 = vdwg.mxu0
    %187 = vmax.xlane.f32.xlu0 %v185
    %v188 = vpop.xlane.xlu0 %187
    %v189 = vsub.f32 %v185, %v188
    %v190 = vmul.f32 %v189, 1.442695
    %v191 = vpow.pop %v190
    %192 = vadd.xlane.f32.xlu0 %v191
    %v193 = vpop.xlane.xlu0 %192
    %v194 = vrcp.pop %v193
    %v195 = vmul.f32 %v193, %v194
    %v196 = vsub.f32 2.0, %v195
    %v197 = vmul.f32 %v194, %v196
    %v198 = vmul.f32 %v191, %v197
    %199 = vst [vmem:[%s6] sm:$0xff] %v198
    // Predicated region
    $region30: #{mlp_forward.1} parent=1 // pred_check
      _
    $region31: #{mlp_forward.1} parent=1 // pred_check_branch
      %201 = sbr.rel (0) target = $region33
    $region32: #{mlp_forward.1} parent=1 // pred_region
      _
    $region33: #{mlp_forward.1} parent=1 // pred_fallthru
      _
    // Predicated region
    $region34: #{mlp_forward.1} parent=1 // pred_check
      _
    $region35: #{mlp_forward.1} parent=1 // pred_check_branch
      %203 = sbr.rel (0) target = $region37
    $region36: #{mlp_forward.1} parent=1 // pred_region
      _
    $region37: #{mlp_forward.1} parent=1 // pred_fallthru
      _
    %204 = vsyncpa [#allocation3], 1

</llo_original>
